<compile_context>
chip_gen: v5e
topology: v5e:2x2
jax: 0.10.0
libtpu: 0.0.40
codegen_flags: <defaults>
</compile_context>

<pallas_src>
import functools

import jax
import jax.numpy as jnp
from jax import lax
from jax.experimental import pallas as pl
from jax.experimental.pallas import tpu as pltpu


def compl_kernel(x_ref, y_ref, ox_ref, w12_ref, w_ref, b_ref, head_ref,
                 out_ref, *, TB, N, H, n_real):
    f32 = jnp.float32
    relu = lambda v: jnp.maximum(v, 0.0)
    cd = w_ref.dtype          # matmul compute dtype (f32 or bf16); f32 accumulate

    x = x_ref[...]                              # (TB*N, 8) f32
    y = y_ref[...]                              # (TB*N, 1) f32
    ox = ox_ref[...].reshape(TB, 8)             # (TB, 1, 8) -> (TB, 8)

    # Resident weight slabs (static, sublane-aligned slices: H % 8 == 0).
    w12 = w12_ref[...]                          # (8, 2H): [w1x | wenc]
    w2 = w_ref[0:H, :]                          # fc2
    wrel_in = w_ref[H:2 * H, :]                 # relate, input_enc columns
    wrel_out = w_ref[2 * H:3 * H, :]            # relate, output_enc columns
    wa2n = w_ref[3 * H:4 * H, :]                # A2N

    b1 = b_ref[0:1, :]
    b2 = b_ref[1:2, :]
    benc = b_ref[2:3, :]
    brel = b_ref[3:4, :]
    ba2n = b_ref[4:5, :]
    w1y = b_ref[5:6, :]                         # fc1 weight row acting on y

    whead = head_ref[0:H, :]                    # (H, 128), cols 0/1 = wmu/wsig
    bhead = head_ref[H:H + 1, :]                # (1, 128), cols 0/1 = bmu/bsig

    # --- merged K=8 matmul: [x ; ox] @ [w1x | wenc] --------------------------
    stacked = jnp.concatenate([x, ox], axis=0).astype(cd)        # (TB*N+TB, 8)
    r = jnp.dot(stacked, w12, preferred_element_type=f32)        # (TB*N+TB, 2H)
    h1_pre = r[0:TB * N, 0:H]                                    # x @ w1x
    oenc_pre = r[TB * N:TB * N + TB, H:2 * H]                    # ox @ wenc

    # input_enc = relu(fc2(relu(fc1(cat(x, y)))))   (fc1 split: x@w1x + y*w1y)
    h1 = relu(h1_pre + y * w1y + b1)                             # (TB*N, H)
    h2 = relu(jnp.dot(h1.astype(cd), w2, preferred_element_type=f32) + b2)

    # output_enc; fold its `relate` contribution BEFORE broadcasting over N.
    oenc = relu(oenc_pre + benc)                                 # (TB, H)
    orel = jnp.dot(oenc.astype(cd), wrel_out, preferred_element_type=f32)

    # relate(cat(output_enc, input_enc)), broadcast orel over the N context pts.
    rel_in = jnp.dot(h2.astype(cd), wrel_in, preferred_element_type=f32)
    io = relu(rel_in.reshape(TB, N, H) + orel[:, None, :] + brel)  # (TB, N, H)

    # mean over the (real) N context points; mask padded rows if N was padded.
    if n_real != N:
        n_idx = lax.broadcasted_iota(jnp.int32, (TB, N, H), 1)
        io = jnp.where(n_idx < n_real, io, 0.0)
    agg = jnp.sum(io, axis=1) * jnp.float32(1.0 / n_real)        # (TB, H)
    agg = relu(jnp.dot(agg.astype(cd), wa2n, preferred_element_type=f32) + ba2n)

    # fused mu / sig head: (TB, H) @ (H, 128) -> lane-dense (TB, 128) store.
    head = jnp.dot(agg.astype(cd), whead, preferred_element_type=f32) + bhead
    col = lax.broadcasted_iota(jnp.int32, (TB, 128), 1)
    out_ref[...] = jnp.where(col == 1, head * head + 0.01, head)


def pack_params(p, compute_dtype=jnp.float32):
    """Pack the 15 parameter tensors into four slabs.

    Returns (w12, w_slab, b_slab, head_slab):
      w12       (8, 2H)     [w1x | wenc], compute_dtype
      w_slab    (4H, H)     [w2; wrel_in; wrel_out; wa2n], compute_dtype
      b_slab    (8, H)      [b1; b2; benc; brel; ba2n; w1y; 0; 0], f32 (VPU ops)
      head_slab (H+8, 128)  rows 0..H-1 = whead (cols 0/1 = wmu/wsig),
                            row H = bhead, rest 0, compute_dtype
    """
    H = p["w2"].shape[0]
    assert H % 8 == 0, "n_hidden must be a multiple of 8 for slab alignment"

    w12 = jnp.concatenate([p["w1x"], p["wenc"]], axis=1)                 # (8, 2H)
    w_slab = jnp.concatenate(
        [p["w2"], p["wrel_in"], p["wrel_out"], p["wa2n"]], axis=0)       # (4H, H)
    b_slab = jnp.concatenate(
        [p["b1"], p["b2"], p["benc"], p["brel"], p["ba2n"], p["w1y"],
         jnp.zeros((2, H), jnp.float32)], axis=0)                        # (8, H)

    head_slab = jnp.zeros((H + 8, 128), jnp.float32)
    head_slab = head_slab.at[0:H, 0:1].set(p["wmu"])
    head_slab = head_slab.at[0:H, 1:2].set(p["wsig"])
    head_slab = head_slab.at[H:H + 1, 0:1].set(p["bmu"])
    head_slab = head_slab.at[H:H + 1, 1:2].set(p["bsig"])

    return (w12.astype(compute_dtype), w_slab.astype(compute_dtype),
            b_slab.astype(jnp.float32), head_slab.astype(compute_dtype))


def _pick_tile_b(B, N, H):
    """Largest batch tile whose ~6 live (TB*N, H) f32 temps fit a 16 MiB budget.

    Conservative across generations (v7x has 64 MiB VMEM/TC vs 128 on v5e/v6e).
    Multi-block tiles are rounded to a multiple of 8 batches for alignment.
    """
    budget = 16 * 1024 * 1024
    per_row = 6 * H * 4
    max_tb = max(budget // (per_row * N), 1)
    if B <= max_tb:
        return B
    return max((max_tb // 8) * 8, 8)


def compl_forward(input_xx, input_yy, output_xx, packed):
    """JAX wrapper: pad/reshape + a single batch-tiled Pallas kernel call."""
    w12, w_slab, b_slab, head_slab = packed
    B, N, Dx = input_xx.shape
    assert Dx == 8
    H = w_slab.shape[1]
    assert H % 8 == 0

    # Pad N to a multiple of 8 (padded context rows are masked in the kernel).
    n_real = N
    n_pad = (-N) % 8
    if n_pad:
        input_xx = jnp.pad(input_xx, ((0, 0), (0, n_pad), (0, 0)))
        input_yy = jnp.pad(input_yy, ((0, 0), (0, n_pad)))
        N = N + n_pad

    # Batch tiling; pad B to a multiple of the tile (padded batches discarded).
    TB = _pick_tile_b(B, N, H)
    b_pad = (-B) % TB
    if b_pad:
        input_xx = jnp.pad(input_xx, ((0, b_pad), (0, 0), (0, 0)))
        input_yy = jnp.pad(input_yy, ((0, b_pad), (0, 0)))
        output_xx = jnp.pad(output_xx, ((0, b_pad), (0, 0), (0, 0)))
    Bp = B + b_pad

    x_flat = input_xx.reshape(Bp * N, 8)
    y_flat = input_yy.reshape(Bp * N, 1)
    ox = output_xx                                   # (Bp, 1, 8)

    grid = (Bp // TB,)
    const2 = lambda i: (0, 0)

    out = pl.pallas_call(
        functools.partial(compl_kernel, TB=TB, N=N, H=H, n_real=n_real),
        out_shape=jax.ShapeDtypeStruct((Bp, 128), jnp.float32),
        grid=grid,
        in_specs=[
            pl.BlockSpec((TB * N, 8), lambda i: (i, 0)),      # x (pipelined)
            pl.BlockSpec((TB * N, 1), lambda i: (i, 0)),      # y (pipelined)
            pl.BlockSpec((TB, 1, 8), lambda i: (i, 0, 0)),    # ox (pipelined)
            pl.BlockSpec((8, 2 * H), const2),                 # w12 (resident)
            pl.BlockSpec((4 * H, H), const2),                 # w_slab (resident)
            pl.BlockSpec((8, H), const2),                     # b_slab (resident)
            pl.BlockSpec((H + 8, 128), const2),               # head (resident)
        ],
        out_specs=pl.BlockSpec((TB, 128), lambda i: (i, 0)),
        compiler_params=pltpu.CompilerParams(
            dimension_semantics=("parallel",),
            vmem_limit_bytes=64 * 1024 * 1024),
    )(x_flat, y_flat, ox, w12, w_slab, b_slab, head_slab)

    head = out[:B]
    return head[:, 0:1], head[:, 1:2]     # mu, sig


def init_params(key, n_hidden):
    """Deterministic init. Weights stored as (in, out) = torch W^T.
    fc1 is split: w1x (8, H) acts on x, w1y (1, H) acts on y."""
    H = n_hidden
    keys = jax.random.split(key, 16)

    def u(k, shape, fan_in):
        bound = 1.0 / jnp.sqrt(jnp.float32(fan_in))
        return jax.random.uniform(k, shape, jnp.float32, -bound, bound)

    return {
        "w1x": u(keys[0], (8, H), 9), "w1y": u(keys[1], (1, H), 9),
        "b1": u(keys[2], (1, H), 9),
        "w2": u(keys[3], (H, H), H), "b2": u(keys[4], (1, H), H),
        "wenc": u(keys[5], (8, H), 8), "benc": u(keys[6], (1, H), 8),
        "wrel_out": u(keys[7], (H, H), 2 * H),
        "wrel_in": u(keys[8], (H, H), 2 * H),
        "brel": u(keys[9], (1, H), 2 * H),
        "wa2n": u(keys[10], (H, H), H), "ba2n": u(keys[11], (1, H), H),
        "wmu": u(keys[12], (H, 1), H), "bmu": u(keys[13], (1, 1), H),
        "wsig": u(keys[14], (H, 1), H), "bsig": u(keys[15], (1, 1), H),
    }


def reference_forward(input_xx, input_yy, output_xx, p):
    """Pure-JAX reference mirroring the PyTorch forward."""
    B, N, _ = input_xx.shape
    relu = lambda v: jnp.maximum(v, 0.0)
    oenc = relu(output_xx.reshape(B, 8) @ p["wenc"] + p["benc"])
    ios = []
    for i in range(N):
        x = input_xx[:, i, :]
        y = input_yy[:, i:i + 1]
        h = relu(relu(x @ p["w1x"] + y @ p["w1y"] + p["b1"]) @ p["w2"] + p["b2"])
        ios.append(relu(oenc @ p["wrel_out"] + h @ p["wrel_in"] + p["brel"]))
    agg = jnp.mean(jnp.stack(ios), axis=0)
    agg = relu(agg @ p["wa2n"] + p["ba2n"])
    mu = agg @ p["wmu"] + p["bmu"]
    sig = (agg @ p["wsig"] + p["bsig"]) ** 2 + 0.01
    return mu, sig


if __name__ == "__main__":
    B, N, H = 2, 8, 32
    key = jax.random.PRNGKey(0)
    k_x, k_y, k_ox, k_p = jax.random.split(key, 4)

    input_xx = jax.random.normal(k_x, (B, N, 8), jnp.float32)
    input_yy = jax.random.normal(k_y, (B, N), jnp.float32)
    output_xx = jax.random.normal(k_ox, (B, 1, 8), jnp.float32)

    params = init_params(k_p, H)
    mu_ref, sig_ref = reference_forward(input_xx, input_yy, output_xx, params)

    # f32 path (default): must match the reference tightly.
    packed_f32 = pack_params(params, compute_dtype=jnp.float32)
    mu, sig = compl_forward(input_xx, input_yy, output_xx, packed_f32)
    jax.block_until_ready((mu, sig))
    assert mu.shape == (B, 1) and sig.shape == (B, 1)
    assert jnp.allclose(mu, mu_ref, atol=1e-5, rtol=1e-5)
    assert jnp.allclose(sig, sig_ref, atol=1e-5, rtol=1e-5)

    # bf16 matmul path (v6e/v7x lever): loose tolerance by construction.
    packed_bf16 = pack_params(params, compute_dtype=jnp.bfloat16)
    mu_b, sig_b = compl_forward(input_xx, input_yy, output_xx, packed_bf16)
    jax.block_until_ready((mu_b, sig_b))
    assert jnp.allclose(mu_b, mu_ref, atol=1.5e-1, rtol=1.5e-1)
    assert jnp.allclose(sig_b, sig_ref, atol=1.5e-1, rtol=1.5e-1)

    print("KERNEL_OK")
</pallas_src>

<mosaic_0001>
module attributes {stable_mosaic.version = 11 : i64} {
  func.func @compl_kernel(%arg0: i32, %arg1: memref<16x8xf32, #tpu.memory_space<vmem>>, %arg2: memref<16x1xf32, #tpu.memory_space<vmem>>, %arg3: memref<2x1x8xf32, #tpu.memory_space<vmem>>, %arg4: memref<8x64xf32, #tpu.memory_space<vmem>>, %arg5: memref<128x32xf32, #tpu.memory_space<vmem>>, %arg6: memref<8x32xf32, #tpu.memory_space<vmem>>, %arg7: memref<40x128xf32, #tpu.memory_space<vmem>>, %arg8: memref<2x128xf32, #tpu.memory_space<vmem>>) attributes {dimension_semantics = [#tpu.dimension_semantics<parallel>], iteration_bounds = array<i64: 1>, scalar_prefetch = 0 : i64, scratch_operands = 0 : i64, tpu.core_type = #tpu.core_type<tc>, window_params = [{transform_indices = @transform_0, window_bounds = array<i64: 16, 8>}, {transform_indices = @transform_1, window_bounds = array<i64: 16, 1>}, {transform_indices = @transform_2, window_bounds = array<i64: 2, 1, 8>}, {pipeline_mode = #tpu.pipeline_mode<synchronous>, transform_indices = @transform_3, window_bounds = array<i64: 8, 64>}, {pipeline_mode = #tpu.pipeline_mode<synchronous>, transform_indices = @transform_4, window_bounds = array<i64: 128, 32>}, {pipeline_mode = #tpu.pipeline_mode<synchronous>, transform_indices = @transform_5, window_bounds = array<i64: 8, 32>}, {pipeline_mode = #tpu.pipeline_mode<synchronous>, transform_indices = @transform_6, window_bounds = array<i64: 40, 128>}, {transform_indices = @transform_7, window_bounds = array<i64: 2, 128>}]} {
    %c0 = arith.constant 0 : index
    %c0_0 = arith.constant 0 : index
    %0 = vector.load %arg1[%c0, %c0_0] : memref<16x8xf32, #tpu.memory_space<vmem>>, vector<16x8xf32>
    %c0_1 = arith.constant 0 : index
    %c0_2 = arith.constant 0 : index
    %1 = vector.load %arg2[%c0_1, %c0_2] : memref<16x1xf32, #tpu.memory_space<vmem>>, vector<16x1xf32>
    %c0_3 = arith.constant 0 : index
    %c0_4 = arith.constant 0 : index
    %c0_5 = arith.constant 0 : index
    %2 = vector.load %arg3[%c0_3, %c0_4, %c0_5] : memref<2x1x8xf32, #tpu.memory_space<vmem>>, vector<2x1x8xf32>
    %3 = vector.shape_cast %2 : vector<2x1x8xf32> to vector<2x8xf32>
    %c0_6 = arith.constant 0 : index
    %c0_7 = arith.constant 0 : index
    %4 = vector.load %arg4[%c0_6, %c0_7] : memref<8x64xf32, #tpu.memory_space<vmem>>, vector<8x64xf32>
    %c0_8 = arith.constant 0 : index
    %c0_9 = arith.constant 0 : index
    %5 = vector.load %arg5[%c0_8, %c0_9] : memref<128x32xf32, #tpu.memory_space<vmem>>, vector<32x32xf32>
    %c32 = arith.constant 32 : index
    %c0_10 = arith.constant 0 : index
    %6 = vector.load %arg5[%c32, %c0_10] : memref<128x32xf32, #tpu.memory_space<vmem>>, vector<32x32xf32>
    %c64 = arith.constant 64 : index
    %c0_11 = arith.constant 0 : index
    %7 = vector.load %arg5[%c64, %c0_11] : memref<128x32xf32, #tpu.memory_space<vmem>>, vector<32x32xf32>
    %c96 = arith.constant 96 : index
    %c0_12 = arith.constant 0 : index
    %8 = vector.load %arg5[%c96, %c0_12] : memref<128x32xf32, #tpu.memory_space<vmem>>, vector<32x32xf32>
    %c0_13 = arith.constant 0 : index
    %c0_14 = arith.constant 0 : index
    %9 = vector.load %arg6[%c0_13, %c0_14] : memref<8x32xf32, #tpu.memory_space<vmem>>, vector<1x32xf32>
    %c1 = arith.constant 1 : index
    %c0_15 = arith.constant 0 : index
    %10 = vector.load %arg6[%c1, %c0_15] : memref<8x32xf32, #tpu.memory_space<vmem>>, vector<1x32xf32>
    %c2 = arith.constant 2 : index
    %c0_16 = arith.constant 0 : index
    %11 = vector.load %arg6[%c2, %c0_16] : memref<8x32xf32, #tpu.memory_space<vmem>>, vector<1x32xf32>
    %c3 = arith.constant 3 : index
    %c0_17 = arith.constant 0 : index
    %12 = vector.load %arg6[%c3, %c0_17] : memref<8x32xf32, #tpu.memory_space<vmem>>, vector<1x32xf32>
    %c4 = arith.constant 4 : index
    %c0_18 = arith.constant 0 : index
    %13 = vector.load %arg6[%c4, %c0_18] : memref<8x32xf32, #tpu.memory_space<vmem>>, vector<1x32xf32>
    %c5 = arith.constant 5 : index
    %c0_19 = arith.constant 0 : index
    %14 = vector.load %arg6[%c5, %c0_19] : memref<8x32xf32, #tpu.memory_space<vmem>>, vector<1x32xf32>
    %c0_20 = arith.constant 0 : index
    %c0_21 = arith.constant 0 : index
    %15 = vector.load %arg7[%c0_20, %c0_21] : memref<40x128xf32, #tpu.memory_space<vmem>>, vector<32x128xf32>
    %c32_22 = arith.constant 32 : index
    %c0_23 = arith.constant 0 : index
    %16 = vector.load %arg7[%c32_22, %c0_23] : memref<40x128xf32, #tpu.memory_space<vmem>>, vector<1x128xf32>
    %17 = tpu.concatenate %0, %3 in 0 : vector<16x8xf32>, vector<2x8xf32> -> vector<18x8xf32>
    %cst = arith.constant dense<0.000000e+00> : vector<18x64xf32>
    %18 = tpu.matmul %17, %4, %cst {dimension_numbers = #tpu.dot_dimension_numbers<[1], [0], [0], [1], [0, 0, 1, 1], [], []>} : vector<18x8xf32>, vector<8x64xf32>, vector<18x64xf32> -> vector<18x64xf32>
    %19 = vector.extract_strided_slice %18 {offsets = [0, 0], sizes = [16, 32], strides = [1, 1]} : vector<18x64xf32> to vector<16x32xf32>
    %20 = vector.extract_strided_slice %18 {offsets = [16, 32], sizes = [2, 32], strides = [1, 1]} : vector<18x64xf32> to vector<2x32xf32>
    %21 = vector.broadcast %1 : vector<16x1xf32> to vector<16x32xf32>
    %22 = vector.broadcast %14 : vector<1x32xf32> to vector<16x32xf32>
    %23 = arith.mulf %21, %22 : vector<16x32xf32>
    %24 = arith.addf %19, %23 : vector<16x32xf32>
    %25 = vector.broadcast %9 : vector<1x32xf32> to vector<16x32xf32>
    %26 = arith.addf %24, %25 : vector<16x32xf32>
    %cst_24 = arith.constant 0.000000e+00 : f32
    %27 = vector.broadcast %cst_24 : f32 to vector<16x32xf32>
    %28 = arith.maximumf %26, %27 : vector<16x32xf32>
    %cst_25 = arith.constant dense<0.000000e+00> : vector<16x32xf32>
    %29 = tpu.matmul %28, %5, %cst_25 {dimension_numbers = #tpu.dot_dimension_numbers<[1], [0], [0], [1], [0, 0, 1, 1], [], []>} : vector<16x32xf32>, vector<32x32xf32>, vector<16x32xf32> -> vector<16x32xf32>
    %30 = vector.broadcast %10 : vector<1x32xf32> to vector<16x32xf32>
    %31 = arith.addf %29, %30 : vector<16x32xf32>
    %cst_26 = arith.constant 0.000000e+00 : f32
    %32 = vector.broadcast %cst_26 : f32 to vector<16x32xf32>
    %33 = arith.maximumf %31, %32 : vector<16x32xf32>
    %34 = vector.broadcast %11 : vector<1x32xf32> to vector<2x32xf32>
    %35 = arith.addf %20, %34 : vector<2x32xf32>
    %cst_27 = arith.constant 0.000000e+00 : f32
    %36 = vector.broadcast %cst_27 : f32 to vector<2x32xf32>
    %37 = arith.maximumf %35, %36 : vector<2x32xf32>
    %cst_28 = arith.constant dense<0.000000e+00> : vector<2x32xf32>
    %38 = tpu.matmul %37, %7, %cst_28 {dimension_numbers = #tpu.dot_dimension_numbers<[1], [0], [0], [1], [0, 0, 1, 1], [], []>} : vector<2x32xf32>, vector<32x32xf32>, vector<2x32xf32> -> vector<2x32xf32>
    %cst_29 = arith.constant dense<0.000000e+00> : vector<16x32xf32>
    %39 = tpu.matmul %33, %6, %cst_29 {dimension_numbers = #tpu.dot_dimension_numbers<[1], [0], [0], [1], [0, 0, 1, 1], [], []>} : vector<16x32xf32>, vector<32x32xf32>, vector<16x32xf32> -> vector<16x32xf32>
    %40 = vector.shape_cast %39 : vector<16x32xf32> to vector<2x8x32xf32>
    %41 = vector.shape_cast %38 : vector<2x32xf32> to vector<2x1x32xf32>
    %42 = vector.broadcast %41 : vector<2x1x32xf32> to vector<2x8x32xf32>
    %43 = arith.addf %40, %42 : vector<2x8x32xf32>
    %44 = vector.shape_cast %12 : vector<1x32xf32> to vector<1x1x32xf32>
    %45 = vector.broadcast %44 : vector<1x1x32xf32> to vector<2x8x32xf32>
    %46 = arith.addf %43, %45 : vector<2x8x32xf32>
    %cst_30 = arith.constant 0.000000e+00 : f32
    %47 = vector.broadcast %cst_30 : f32 to vector<2x8x32xf32>
    %48 = arith.maximumf %46, %47 : vector<2x8x32xf32>
    %cst_31 = arith.constant dense<0.000000e+00> : vector<2x32xf32>
    %49 = vector.multi_reduction <add>, %48, %cst_31 [1] : vector<2x8x32xf32> to vector<2x32xf32>
    %cst_32 = arith.constant 1.250000e-01 : f32
    %50 = vector.broadcast %cst_32 : f32 to vector<2x32xf32>
    %51 = arith.mulf %49, %50 : vector<2x32xf32>
    %cst_33 = arith.constant dense<0.000000e+00> : vector<2x32xf32>
    %52 = tpu.matmul %51, %8, %cst_33 {dimension_numbers = #tpu.dot_dimension_numbers<[1], [0], [0], [1], [0, 0, 1, 1], [], []>} : vector<2x32xf32>, vector<32x32xf32>, vector<2x32xf32> -> vector<2x32xf32>
    %53 = vector.broadcast %13 : vector<1x32xf32> to vector<2x32xf32>
    %54 = arith.addf %52, %53 : vector<2x32xf32>
    %cst_34 = arith.constant 0.000000e+00 : f32
    %55 = vector.broadcast %cst_34 : f32 to vector<2x32xf32>
    %56 = arith.maximumf %54, %55 : vector<2x32xf32>
    %cst_35 = arith.constant dense<0.000000e+00> : vector<2x128xf32>
    %57 = tpu.matmul %56, %15, %cst_35 {dimension_numbers = #tpu.dot_dimension_numbers<[1], [0], [0], [1], [0, 0, 1, 1], [], []>} : vector<2x32xf32>, vector<32x128xf32>, vector<2x128xf32> -> vector<2x128xf32>
    %58 = vector.broadcast %16 : vector<1x128xf32> to vector<2x128xf32>
    %59 = arith.addf %57, %58 : vector<2x128xf32>
    %60 = tpu.iota {dimensions = array<i32: 1>} : vector<2x128xi32>
    %c1_i32 = arith.constant 1 : i32
    %61 = vector.broadcast %c1_i32 : i32 to vector<2x128xi32>
    %62 = arith.cmpi eq, %60, %61 : vector<2x128xi32>
    %63 = arith.mulf %59, %59 : vector<2x128xf32>
    %cst_36 = arith.constant 0.00999999977 : f32
    %64 = vector.broadcast %cst_36 : f32 to vector<2x128xf32>
    %65 = arith.addf %63, %64 : vector<2x128xf32>
    %66 = arith.select %62, %65, %59 : vector<2x128xi1>, vector<2x128xf32>
    %c0_37 = arith.constant 0 : index
    %c0_38 = arith.constant 0 : index
    %67 = vector.load %arg8[%c0_37, %c0_38] : memref<2x128xf32, #tpu.memory_space<vmem>>, vector<2x128xf32>
    tpu.vector_store %arg8[%c0_37, %c0_38], %66 {strides = array<i32>} : memref<2x128xf32, #tpu.memory_space<vmem>>, vector<2x128xf32>,
    return
  }
  func.func @transform_0(%arg0: i32) -> (i32, i32) {
    %c0_i32 = arith.constant 0 : i32
    %c0_i32_0 = arith.constant 0 : i32
    return %arg0, %c0_i32 : i32, i32
  }
  func.func @transform_1(%arg0: i32) -> (i32, i32) {
    %c0_i32 = arith.constant 0 : i32
    %c0_i32_0 = arith.constant 0 : i32
    return %arg0, %c0_i32 : i32, i32
  }
  func.func @transform_2(%arg0: i32) -> (i32, i32, i32) {
    %c0_i32 = arith.constant 0 : i32
    %c0_i32_0 = arith.constant 0 : i32
    %c0_i32_1 = arith.constant 0 : i32
    return %arg0, %c0_i32, %c0_i32_0 : i32, i32, i32
  }
  func.func @transform_3(%arg0: i32) -> (i32, i32) {
    %c0_i32 = arith.constant 0 : i32
    %c0_i32_0 = arith.constant 0 : i32
    %c0_i32_1 = arith.constant 0 : i32
    return %c0_i32, %c0_i32_0 : i32, i32
  }
  func.func @transform_4(%arg0: i32) -> (i32, i32) {
    %c0_i32 = arith.constant 0 : i32
    %c0_i32_0 = arith.constant 0 : i32
    %c0_i32_1 = arith.constant 0 : i32
    return %c0_i32, %c0_i32_0 : i32, i32
  }
  func.func @transform_5(%arg0: i32) -> (i32, i32) {
    %c0_i32 = arith.constant 0 : i32
    %c0_i32_0 = arith.constant 0 : i32
    %c0_i32_1 = arith.constant 0 : i32
    return %c0_i32, %c0_i32_0 : i32, i32
  }
  func.func @transform_6(%arg0: i32) -> (i32, i32) {
    %c0_i32 = arith.constant 0 : i32
    %c0_i32_0 = arith.constant 0 : i32
    %c0_i32_1 = arith.constant 0 : i32
    return %c0_i32, %c0_i32_0 : i32, i32
  }
  func.func @transform_7(%arg0: i32) -> (i32, i32) {
    %c0_i32 = arith.constant 0 : i32
    %c0_i32_0 = arith.constant 0 : i32
    return %arg0, %c0_i32 : i32, i32
  }
}

</mosaic_0001>

<llo_original>
// kernel: tpu_custom_call.1
$region0: #{tpu_custom_call.1}
  #allocation0 [shape = 'u32[]', space=smem, size = 0x4, offset = 0x4, fixed_abs, tag = 'smem constant byte address 0x4 - core index']
  #allocation1 [shape = 'u32[72,128]{1,0:T(1,128)}', space=vmem, size = 0x9000, scoped, tag = 'internal scratch']
  %s0 = inlined_call_operand.vmem [shape: f32[16,8], index: 0, kind: input, shape index: {}]
  %s1 = inlined_call_operand.vmem [shape: f32[16,1], index: 1, kind: input, shape index: {}]
  %s2 = inlined_call_operand.vmem [shape: f32[2,1,8], index: 2, kind: input, shape index: {}]
  %s3 = inlined_call_operand.vmem [shape: f32[8,64], index: 3, kind: input, shape index: {}]
  %s4 = inlined_call_operand.vmem [shape: f32[128,32], index: 4, kind: input, shape index: {}]
  %s5 = inlined_call_operand.vmem [shape: f32[8,32], index: 5, kind: input, shape index: {}]
  %s6 = inlined_call_operand.vmem [shape: f32[40,128], index: 6, kind: input, shape index: {}]
  %s7 = inlined_call_operand.hbm [shape: f32[2,128], index: 7, kind: output, shape index: {}]
  %s8 = sld [smem:[#allocation0]]
  $region38: #{tpu_custom_call.1} parent=0
    _
  %s10 = ssub.s32 1, %s8
  %s11 = scalar_select 0, %s10, %s8
  $region1: #{tpu_custom_call.1} parent=0
    #allocation2 [shape = 'u8[1024]{0}', space=vmem, size = 0x400, scoped, tag = 'output window, operand 0, single buffered']
    #allocation3 [shape = 's32[1]{0}', space=sflag, size = 0x4, scoped, tag = 'scoped memory for tpu_custom_call.1']
    %12 = vsyncpa [#allocation3], 0
    // Predicated region
    $region2: #{tpu_custom_call.1} parent=1 // pred_check
      _
    $region3: #{tpu_custom_call.1} parent=1 // pred_check_branch
      %14 = sbr.rel (0) target = $region5
    $region4: #{tpu_custom_call.1} parent=1 // pred_region
      _
    $region5: #{tpu_custom_call.1} parent=1 // pred_fallthru
      _
    // Predicated region
    $region6: #{tpu_custom_call.1} parent=1 // pred_check
      _
    $region7: #{tpu_custom_call.1} parent=1 // pred_check_branch
      %16 = sbr.rel (0) target = $region9
    $region8: #{tpu_custom_call.1} parent=1 // pred_region
      _
    $region9: #{tpu_custom_call.1} parent=1 // pred_fallthru
      _
    // Predicated region
    $region10: #{tpu_custom_call.1} parent=1 // pred_check
      _
    $region11: #{tpu_custom_call.1} parent=1 // pred_check_branch
      %18 = sbr.rel (0) target = $region13
    $region12: #{tpu_custom_call.1} parent=1 // pred_region
      _
    $region13: #{tpu_custom_call.1} parent=1 // pred_fallthru
      _
    // Predicated region
    $region14: #{tpu_custom_call.1} parent=1 // pred_check
      _
    $region15: #{tpu_custom_call.1} parent=1 // pred_check_branch
      %20 = sbr.rel (0) target = $region17
    $region16: #{tpu_custom_call.1} parent=1 // pred_region
      _
    $region17: #{tpu_custom_call.1} parent=1 // pred_fallthru
      _
    // Predicated region
    $region18: #{tpu_custom_call.1} parent=1 // pred_check
      _
    $region19: #{tpu_custom_call.1} parent=1 // pred_check_branch
      %22 = sbr.rel (0) target = $region21
    $region20: #{tpu_custom_call.1} parent=1 // pred_region
      _
    $region21: #{tpu_custom_call.1} parent=1 // pred_fallthru
      _
    // Predicated region
    $region22: #{tpu_custom_call.1} parent=1 // pred_check
      _
    $region23: #{tpu_custom_call.1} parent=1 // pred_check_branch
      %24 = sbr.rel (0) target = $region25
    $region24: #{tpu_custom_call.1} parent=1 // pred_region
      _
    $region25: #{tpu_custom_call.1} parent=1 // pred_fallthru
      _
    // Predicated region
    $region26: #{tpu_custom_call.1} parent=1 // pred_check
      _
    $region27: #{tpu_custom_call.1} parent=1 // pred_check_branch
      %26 = sbr.rel (0) target = $region29
    $region28: #{tpu_custom_call.1} parent=1 // pred_region
      _
    $region29: #{tpu_custom_call.1} parent=1 // pred_fallthru
      _
    %v27 = vld [vmem:[%s0] sm:$0xff]
    %v28 = vld [vmem:[%s0 + $0x8] sm:$0xff]
    %v29 = vld [vmem:[%s1] sm:$0xff]
    %v30 = vld [vmem:[%s1 + $0x8] sm:$0xff]
    %v31 = vld [vmem:[%s2] sm:$0x1]
    %v32 = vld [vmem:[%s2 + $0x1] sm:$0x1]
    %v33 = vld [vmem:[%s3] sm:$0xff]
    %v34 = vld [vmem:[%s4] sm:$0xff]
    %v35 = vld [vmem:[%s4 + $0x8] sm:$0xff]
    %v36 = vld [vmem:[%s4 + $0x10] sm:$0xff]
    %v37 = vld [vmem:[%s4 + $0x18] sm:$0xff]
    %v38 = vld [vmem:[%s4 + $0x20] sm:$0xff]
    %v39 = vld [vmem:[%s4 + $0x28] sm:$0xff]
    %v40 = vld [vmem:[%s4 + $0x30] sm:$0xff]
    %v41 = vld [vmem:[%s4 + $0x38] sm:$0xff]
    %v42 = vld [vmem:[%s4 + $0x40] sm:$0xff]
    %v43 = vld [vmem:[%s4 + $0x48] sm:$0xff]
    %v44 = vld [vmem:[%s4 + $0x50] sm:$0xff]
    %v45 = vld [vmem:[%s4 + $0x58] sm:$0xff]
    %v46 = vld [vmem:[%s4 + $0x60] sm:$0xff]
    %v47 = vld [vmem:[%s4 + $0x68] sm:$0xff]
    %v48 = vld [vmem:[%s4 + $0x70] sm:$0xff]
    %v49 = vld [vmem:[%s4 + $0x78] sm:$0xff]
    %v50 = vld [vmem:[%s5] sm:$0x1]
    %v51 = vld [vmem:[%s5 + $0x1] sm:$0x1]
    %v52 = vld [vmem:[%s5 + $0x2] sm:$0x1]
    %v53 = vld [vmem:[%s5 + $0x3] sm:$0x1]
    %v54 = vld [vmem:[%s5 + $0x4] sm:$0x1]
    %v55 = vld [vmem:[%s5 + $0x5] sm:$0x1]
    %v56 = vld [vmem:[%s6] sm:$0xff]
    %v57 = vld [vmem:[%s6 + $0x8] sm:$0xff]
    %v58 = vld [vmem:[%s6 + $0x10] sm:$0xff]
    %v59 = vld [vmem:[%s6 + $0x18] sm:$0xff]
    %v60 = vld [vmem:[%s6 + $0x20] sm:$0x1]
    %63 = vst [vmem:[#allocation1] ss:$9 sm:$0xff] %v31
    %s64 = scalar_lea.vmem [#allocation1], 1
    %65 = vst [vmem:[%s64] ss:$9 sm:$0xff] %v32
    %v66 = vld [vmem:[#allocation1] sm:$0xff]
    %vm67 = vcmask 64512
    %v69 = vsel %vm67, %v27, 0
    %v72 = vsel %vm67, %v28, 0
    %v74 = vsel %vm67, %v66, 0
    %76 = vmatpush.msra.mxu0 0.0
    %77 = vmatpush.msra.mxu0 0.0
    %78 = vmatpush.msra.mxu0 0.0
    %79 = vmatpush.msra.mxu0 0.0
    %80 = vmatpush.msra.mxu0 0.0
    %81 = vmatpush.msra.mxu0 0.0
    %82 = vmatpush.msra.mxu0 0.0
    %83 = vmatpush.msra.mxu0 0.0
    %84 = vmatpush.msra.mxu0 0.0
    %85 = vmatpush.msra.mxu0 0.0
    %86 = vmatpush.msra.mxu0 0.0
    %87 = vmatpush.msra.mxu0 0.0
    %88 = vmatpush.msra.mxu0 0.0
    %89 = vmatpush.msra.mxu0 0.0
    %90 = vmatpush.msra.mxu0 0.0
    %91 = vmatpush.msra.mxu0 %v33
    %92 = vmatmul.f32.gmra.mxu0 %v69
    %v93 = vpop.f32.mrf.mxu0
    %v94 = vadd.f32 0.0, %v93
    %95 = vmatmul.f32.gmra.mxu0 %v72
    %v96 = vpop.f32.mrf.mxu0
    %v97 = vadd.f32 0.0, %v96
    %98 = vmatmul.f32.gmra.mxu0 %v74
    %v99 = vpop.f32.mrf.mxu0
    %v100 = vadd.f32 0.0, %v99
    %101 = vdwg.mxu0
    %103 = vset.pattern.permute.xlu0 0
    %104 = vperm.xlu0 %103, %v29
    %v105 = vpop.permute.xlu0 %104
    %108 = vset.pattern.permute.xlu0 0
    %109 = vperm.xlu0 %108, %v30
    %v110 = vpop.permute.xlu0 %109
    %v112 = vperm.slane %v55, 0
    %v113 = vmul.f32 %v105, %v112
    %v114 = vmul.f32 %v110, %v112
    %v115 = vadd.f32 %v94, %v113
    %v116 = vadd.f32 %v97, %v114
    %v117 = vperm.slane %v50, 0
    %v118 = vadd.f32 %v115, %v117
    %v119 = vadd.f32 %v116, %v117
    %v120 = vmax.f32 %v118, 0.0
    %v121 = vmax.f32 %v119, 0.0
    %v122 = vperm.slane %v51, 0
    %vm123 = vcmask 261120
    %v125 = vsel %vm123, %v120, 0
    %v128 = vsel %vm123, %v121, 0
    %130 = vmatpush.msra.mxu0 0.0
    %131 = vmatpush.msra.mxu0 0.0
    %132 = vmatpush.msra.mxu0 0.0
    %133 = vmatpush.msra.mxu0 0.0
    %134 = vmatpush.msra.mxu0 0.0
    %135 = vmatpush.msra.mxu0 0.0
    %136 = vmatpush.msra.mxu0 0.0
    %137 = vmatpush.msra.mxu0 0.0
    %138 = vmatpush.msra.mxu0 0.0
    %139 = vmatpush.msra.mxu0 0.0
    %140 = vmatpush.msra.mxu0 0.0
    %141 = vmatpush.msra.mxu0 0.0
    %142 = vmatpush.msra.mxu0 %v37
    %143 = vmatpush.msra.mxu0 %v36
    %144 = vmatpush.msra.mxu0 %v35
    %145 = vmatpush.msra.mxu0 %v34
    %146 = vmatmul.f32.gmra.mxu0 %v125
    %v147 = vpop.f32.mrf.mxu0
    %v148 = vadd.f32 %v122, %v147
    %149 = vmatmul.f32.gmra.mxu0 %v128
    %v150 = vpop.f32.mrf.mxu0
    %v151 = vadd.f32 %v122, %v150
    %152 = vdwg.mxu0
    %v153 = vmax.f32 %v148, 0.0
    %v154 = vmax.f32 %v151, 0.0
    %v155 = vperm.slane %v52, 0
    %157 = vrot.lane.b32.xlu0 %v155, 32
    %v158 = vpop.permute.xlu0 %157
    %v160 = vadd.f32 %v100, %v158
    %v161 = vmax.f32 %v160, 0.0
    %163 = vrot.lane.b32.xlu0 %v161, 96
    %v164 = vpop.permute.xlu0 %163
    %v165 = vsel %vm123, %v164, 0
    %167 = vmatpush.msra.mxu0 0.0
    %168 = vmatpush.msra.mxu0 0.0
    %169 = vmatpush.msra.mxu0 0.0
    %170 = vmatpush.msra.mxu0 0.0
    %171 = vmatpush.msra.mxu0 0.0
    %172 = vmatpush.msra.mxu0 0.0
    %173 = vmatpush.msra.mxu0 0.0
    %174 = vmatpush.msra.mxu0 0.0
    %175 = vmatpush.msra.mxu0 0.0
    %176 = vmatpush.msra.mxu0 0.0
    %177 = vmatpush.msra.mxu0 0.0
    %178 = vmatpush.msra.mxu0 0.0
    %179 = vmatpush.msra.mxu0 %v45
    %180 = vmatpush.msra.mxu0 %v44
    %181 = vmatpush.msra.mxu0 %v43
    %182 = vmatpush.msra.mxu0 %v42
    %183 = vmatmul.f32.gmra.mxu0 %v165
    %v184 = vpop.f32.mrf.mxu0
    %v185 = vadd.f32 0.0, %v184
    %186 = vdwg.mxu0
    %v188 = vsel %vm123, %v153, 0
    %v191 = vsel %vm123, %v154, 0
    %193 = vmatpush.msra.mxu0 0.0
    %194 = vmatpush.msra.mxu0 0.0
    %195 = vmatpush.msra.mxu0 0.0
    %196 = vmatpush.msra.mxu0 0.0
    %197 = vmatpush.msra.mxu0 0.0
    %198 = vmatpush.msra.mxu0 0.0
    %199 = vmatpush.msra.mxu0 0.0
    %200 = vmatpush.msra.mxu0 0.0
    %201 = vmatpush.msra.mxu0 0.0
    %202 = vmatpush.msra.mxu0 0.0
    %203 = vmatpush.msra.mxu0 0.0
    %204 = vmatpush.msra.mxu0 0.0
    %205 = vmatpush.msra.mxu0 %v41
    %206 = vmatpush.msra.mxu0 %v40
    %207 = vmatpush.msra.mxu0 %v39
    %208 = vmatpush.msra.mxu0 %v38
    %209 = vmatmul.f32.gmra.mxu0 %v188
    %v210 = vpop.f32.mrf.mxu0
    %v211 = vadd.f32 0.0, %v210
    %212 = vmatmul.f32.gmra.mxu0 %v191
    %v213 = vpop.f32.mrf.mxu0
    %v214 = vadd.f32 0.0, %v213
    %215 = vdwg.mxu0
    %v217 = vrot.slane %v185, 1
    %v218 = vperm.slane %v185, 0
    %v219 = vperm.slane %v217, 0
    %v222 = vadd.f32 %v211, %v218
    %v223 = vadd.f32 %v214, %v219
    %v224 = vperm.slane %v53, 0
    %v225 = vadd.f32 %v222, %v224
    %v226 = vadd.f32 %v223, %v224
    %v227 = vmax.f32 %v225, 0.0
    %v228 = vmax.f32 %v226, 0.0
    %v229 = vsel %vm123, %v227, 0.0
    %v230 = vrot.slane %v229, 4
    %v231 = vadd.f32 %v229, %v230
    %v232 = vrot.slane %v231, 2
    %v233 = vadd.f32 %v231, %v232
    %v234 = vrot.slane %v233, 1
    %v235 = vadd.f32 %v233, %v234
    %v236 = vsel %vm123, %v228, 0.0
    %v237 = vrot.slane %v236, 4
    %v238 = vadd.f32 %v236, %v237
    %v239 = vrot.slane %v238, 2
    %v240 = vadd.f32 %v238, %v239
    %v241 = vrot.slane %v240, 1
    %v242 = vadd.f32 %v240, %v241
    %v243 = vmul.f32 %v235, 0.125
    %v244 = vmul.f32 %v242, 0.125
    %v245 = vperm.slane %v54, 0
    %vm248 = vcmask 1041409
    %v249 = vsel %vm248, %v244, %v243
    %v250 = vsel %vm123, %v249, 0
    %252 = vmatpush.msra.mxu0 0.0
    %253 = vmatpush.msra.mxu0 0.0
    %254 = vmatpush.msra.mxu0 0.0
    %255 = vmatpush.msra.mxu0 0.0
    %256 = vmatpush.msra.mxu0 0.0
    %257 = vmatpush.msra.mxu0 0.0
    %258 = vmatpush.msra.mxu0 0.0
    %259 = vmatpush.msra.mxu0 0.0
    %260 = vmatpush.msra.mxu0 0.0
    %261 = vmatpush.msra.mxu0 0.0
    %262 = vmatpush.msra.mxu0 0.0
    %263 = vmatpush.msra.mxu0 0.0
    %264 = vmatpush.msra.mxu0 %v49
    %265 = vmatpush.msra.mxu0 %v48
    %266 = vmatpush.msra.mxu0 %v47
    %267 = vmatpush.msra.mxu0 %v46
    %268 = vmatmul.f32.gmra.mxu0 %v250
    %v269 = vpop.f32.mrf.mxu0
    %v270 = vadd.f32 %v245, %v269
    %271 = vdwg.mxu0
    %v272 = vmax.f32 %v270, 0.0
    %v273 = vperm.slane %v60, 0
    %v275 = vsel %vm123, %v272, 0
    %277 = vmatpush.msra.mxu0 0.0
    %278 = vmatpush.msra.mxu0 0.0
    %279 = vmatpush.msra.mxu0 0.0
    %280 = vmatpush.msra.mxu0 0.0
    %281 = vmatpush.msra.mxu0 0.0
    %282 = vmatpush.msra.mxu0 0.0
    %283 = vmatpush.msra.mxu0 0.0
    %284 = vmatpush.msra.mxu0 0.0
    %285 = vmatpush.msra.mxu0 0.0
    %286 = vmatpush.msra.mxu0 0.0
    %287 = vmatpush.msra.mxu0 0.0
    %288 = vmatpush.msra.mxu0 0.0
    %289 = vmatpush.msra.mxu0 %v59
    %290 = vmatpush.msra.mxu0 %v58
    %291 = vmatpush.msra.mxu0 %v57
    %292 = vmatpush.msra.mxu0 %v56
    %293 = vmatmul.f32.gmra.mxu0 %v275
    %v294 = vpop.f32.mrf.mxu0
    %v295 = vadd.f32 %v273, %v294
    %296 = vdwg.mxu0
    %v297 = vlaneseq
    %v298 = vand.u32 %v297, 127
    %vm299 = vcmp.eq.s32.totalorder %v298, 1
    %v300 = vmul.f32 %v295, %v295
    %v301 = vadd.f32 %v300, 0.01
    %v302 = vsel %vm299, %v301, %v295
    %303 = vst [vmem:[#allocation2] sm:$0x3] %v302
    // Predicated region
    $region30: #{tpu_custom_call.1} parent=1 // pred_check
      _
    $region31: #{tpu_custom_call.1} parent=1 // pred_check_branch
      %305 = sbr.rel (0) target = $region33
    $region32: #{tpu_custom_call.1} parent=1 // pred_region
      %307 = vsyncadd [#allocation3], 0
      %s309 = sshll.u32 [#allocation2], 4
      %s310 = int_to_ptr.vmem [resolvable:$true] %s309
      %s311 = sshll.u32 %s7, 4
      %s312 = int_to_ptr.hbm [resolvable:$true] %s311
      %314 = dma.vmem_to_hbm [thread:$0]  %s310, 32, %s312, [#allocation3]
    $region33: #{tpu_custom_call.1} parent=1 // pred_fallthru
      _
    // Predicated region
    $region34: #{tpu_custom_call.1} parent=1 // pred_check
      _
    $region35: #{tpu_custom_call.1} parent=1 // pred_check_branch
      %316 = sbr.rel (0) target = $region37
    $region36: #{tpu_custom_call.1} parent=1 // pred_region
      %318 = dma.done [#allocation3], 32
    $region37: #{tpu_custom_call.1} parent=1 // pred_fallthru
      _
    %319 = vsyncpa [#allocation3], 1

</llo_original>
